<compile_context>
chip_gen: v7x
topology: tpu7x:2x2x1
jax: 0.10.0
libtpu: 0.0.40
codegen_flags: <defaults>
</compile_context>

<pallas_src>
import functools
from typing import NamedTuple

import jax
import jax.numpy as jnp
import numpy as np
from jax import lax
from jax.experimental import pallas as pl
from jax.experimental.pallas import tpu as pltpu

_LANE = 128      # TPU lane width (minor vreg dim)
_SUBLANE = 8     # TPU sublane count (second-minor vreg dim)


def _cdiv(a, b):
    return (a + b - 1) // b


def _round_up(x, m):
    return _cdiv(x, m) * m


def _vmem_limit_bytes():
    """Scoped-VMEM limit valid on v5e/v6e (128 MiB VMEM) and v7x (64 MiB VMEM)."""
    try:
        cap = pltpu.get_tpu_info().vmem_capacity_bytes
    except Exception:
        cap = 64 * 1024 * 1024
    return int(min(cap // 2, 64 * 1024 * 1024))


def _default_tk_cap():
    """K-tile cap.  v6e/v7x HBM is fast enough that the ~0.35us/grid-step
    overhead shows up, so use bigger tiles there; v5e (and unknown chips) keep
    the conservative 8K cap."""
    try:
        name = str(getattr(pltpu.get_tpu_info(), "chip_version", "")).lower()
    except Exception:
        return 8192
    if "7" in name:
        return 32768
    if "6" in name:
        return 16384
    return 8192


def _choose_tk(k, n_pad, d, vmem_limit, tk_max=None):
    """K tile sized from real (unpadded-D) VMEM pressure, minimizing K padding."""
    if tk_max is None:
        tk_max = _default_tk_cap()
    # Resident f32 blocks: accumulator + target (n_pad, d), bias (1, d),
    # lane-dense cossim output block (n_pad, 128).
    fixed = 4 * n_pad * d * 2 + 4 * d + 4 * n_pad * _LANE
    per_k = 2 * 2 * (n_pad + d)            # bf16, double-buffered x + w K-slabs
    budget = max((vmem_limit * 3) // 4 - fixed, per_k * _LANE)
    tk_budget = max(_LANE, (budget // per_k) // _LANE * _LANE)
    tk_cap = max(_LANE, min(tk_budget, tk_max))
    # Fix the tile count from the cap, then take the smallest lane-aligned tile
    # covering K with that count (avoids padding K by up to tk-1 zero rows).
    n_tiles = max(1, _cdiv(k, tk_cap))
    tk = _round_up(_cdiv(k, n_tiles), _LANE)
    return int(min(tk, _round_up(k, _LANE)))


class DinoProjection(NamedTuple):
    """One-time-prepared synthetic-DINO projection parameters."""
    w: jax.Array          # (k_pad, D) bf16, zero-padded along K
    b: jax.Array          # (1, D) f32
    k: int                # true K = C*H*W
    d: int                # true feature dim
    tk: int               # K tile (multiple of 128)
    k_pad: int            # padded K (= n_tiles * tk)
    vmem_limit: int


def prepare_dino_projection(w, b, *, tk=None, tk_max=None, batch_hint=_SUBLANE):
    """Hoisted weight prep: K-pad + bf16 cast happen ONCE, not per loss call."""
    k, d = w.shape
    vmem_limit = _vmem_limit_bytes()
    n_pad_hint = _round_up(max(int(batch_hint), 1), _SUBLANE)
    if tk is None:
        tk = _choose_tk(k, n_pad_hint, d, vmem_limit, tk_max)
    tk = _round_up(min(int(tk), _round_up(k, _LANE)), _LANE)
    k_pad = _round_up(k, tk)
    w_bf16 = jnp.pad(w.astype(jnp.float32),
                     ((0, k_pad - k), (0, 0))).astype(jnp.bfloat16)
    b_f32 = b.astype(jnp.float32).reshape(1, d)
    return DinoProjection(w=w_bf16, b=b_f32, k=int(k), d=int(d), tk=int(tk),
                          k_pad=int(k_pad), vmem_limit=int(vmem_limit))


def _dino_loss_kernel(x_ref, w_ref, b_ref, t_ref, out_ref, acc_ref, *,
                      loss_identifier, n_true, d_true):
    """Fused synthetic-DINO linear projection + loss, tiled over K.

    x_ref : (N_pad, TK)  bf16 flattened image tile
    w_ref : (TK, D)      bf16 projection weight tile (true D, no lane padding)
    b_ref : (1, D)       f32 bias (resident)
    t_ref : (N_pad, D)   f32 target features (resident)
    out_ref: (N_pad, 128) f32 VMEM for 'cossim', (1, 1) f32 SMEM for '1'/'2'
    acc_ref: (N_pad, D)  f32 accumulator scratch
    """
    k = pl.program_id(0)

    @pl.when(k == 0)
    def _():
        acc_ref[...] = jnp.zeros_like(acc_ref)

    # MXU: bf16 inputs, f32 accumulation.
    acc_ref[...] += jnp.dot(x_ref[...], w_ref[...],
                            preferred_element_type=jnp.float32)

    @pl.when(k == pl.num_programs(0) - 1)
    def _():
        feat = acc_ref[...] + b_ref[...]   # bias added exactly once, at finalize
        t = t_ref[...]

        if loss_identifier == "cossim":
            # torch.nn.CosineSimilarity(dim=1, eps=1e-8); forward returns 1 - cos.
            dot = jnp.sum(feat * t, axis=-1, keepdims=True)
            nf2 = jnp.sum(feat * feat, axis=-1, keepdims=True)
            nt2 = jnp.sum(t * t, axis=-1, keepdims=True)
            # cos = dot / max(||f||*||t||, 1e-8) == dot * rsqrt(max(nf2*nt2, 1e-16))
            inv = lax.rsqrt(jnp.maximum(nf2 * nt2, 1e-16))
            res = 1.0 - dot * inv                                 # (N_pad, 1)
            out_ref[...] = jnp.broadcast_to(res, out_ref.shape)   # lane-dense store
        else:
            # D is not padded anymore; only padded batch rows need masking
            # (their feat equals the bias, not zero) before the mean reduction.
            row = lax.broadcasted_iota(jnp.int32, feat.shape, 0)
            diff = jnp.where(row < n_true, feat - t, 0.0)
            if loss_identifier == "1":      # torch.nn.L1Loss(reduction='mean')
                total = jnp.sum(jnp.abs(diff))
            elif loss_identifier == "2":    # torch.nn.MSELoss(reduction='mean')
                total = jnp.sum(diff * diff)
            else:
                raise NotImplementedError(loss_identifier)
            out_ref[0, 0] = total * (1.0 / float(n_true * d_true))


def dino_loss(output_nchw, target, proj: DinoProjection, loss_identifier):
    """JAX wrapper reproducing DinoLoss.forward(output, target)."""
    n, c, h, wd = output_nchw.shape
    k, d, tk, k_pad = proj.k, proj.d, proj.tk, proj.k_pad
    assert c * h * wd == k, "projection was prepared for a different image shape"

    n_pad = _round_up(max(n, 1), _SUBLANE)
    n_k = k_pad // tk

    # torch.flatten(x, 1) order; bf16 stream (x is bandwidth-trivial, MXU
    # accumulation stays f32).  Weight was prepared once in prepare_dino_projection.
    x2d = output_nchw.reshape(n, k).astype(jnp.bfloat16)
    x2d = jnp.pad(x2d, ((0, n_pad - n), (0, k_pad - k)))
    t2d = jnp.pad(target.astype(jnp.float32), ((0, n_pad - n), (0, 0)))

    if loss_identifier == "cossim":
        out_shape = jax.ShapeDtypeStruct((n_pad, _LANE), jnp.float32)
        out_spec = pl.BlockSpec((n_pad, _LANE), lambda i: (0, 0))
        out_elems = n_pad * _LANE
    elif loss_identifier in ("1", "2"):
        out_shape = jax.ShapeDtypeStruct((1, 1), jnp.float32)
        out_spec = pl.BlockSpec(memory_space=pltpu.MemorySpace.SMEM)
        out_elems = 1
    else:
        raise NotImplementedError(loss_identifier)

    kernel = functools.partial(_dino_loss_kernel,
                               loss_identifier=loss_identifier,
                               n_true=n, d_true=d)

    cost = pl.CostEstimate(
        flops=2 * n_pad * k_pad * d,
        transcendentals=n_pad if loss_identifier == "cossim" else 0,
        bytes_accessed=int(x2d.size) * 2 + int(proj.w.size) * 2
                       + int(proj.b.size) * 4 + int(t2d.size) * 4 + out_elems * 4)

    result = pl.pallas_call(
        kernel,
        out_shape=out_shape,
        grid_spec=pltpu.PrefetchScalarGridSpec(
            num_scalar_prefetch=0,
            grid=(n_k,),
            in_specs=[
                pl.BlockSpec((n_pad, tk), lambda i: (0, i)),   # x: K tiled (lanes)
                pl.BlockSpec((tk, d), lambda i: (i, 0)),       # w: K tiled, full-D block
                pl.BlockSpec((1, d), lambda i: (0, 0)),        # bias (resident)
                pl.BlockSpec((n_pad, d), lambda i: (0, 0)),    # target (resident)
            ],
            out_specs=out_spec,
            scratch_shapes=[pltpu.VMEM((n_pad, d), jnp.float32)],
        ),
        compiler_params=pltpu.CompilerParams(
            dimension_semantics=("arbitrary",),   # K is a reduction axis
            vmem_limit_bytes=proj.vmem_limit,
        ),
        cost_estimate=cost,
    )(x2d, proj.w, proj.b, t2d)

    if loss_identifier == "cossim":
        return result[:n, 0]       # matches torch: (N,) vector of 1 - cos
    return result.reshape(())      # matches torch: scalar mean loss


def _reference(output_nchw, target, w, b, loss_identifier):
    n = output_nchw.shape[0]
    x = output_nchw.reshape(n, -1).astype(jnp.float32)
    feat = x @ w + b[None, :]
    t = target.astype(jnp.float32)
    if loss_identifier == "cossim":
        dot = jnp.sum(feat * t, axis=-1)
        nf = jnp.sqrt(jnp.sum(feat * feat, axis=-1))
        nt = jnp.sqrt(jnp.sum(t * t, axis=-1))
        return 1.0 - dot / jnp.maximum(nf * nt, 1e-8)
    if loss_identifier == "1":
        return jnp.mean(jnp.abs(feat - t))
    return jnp.mean((feat - t) ** 2)


if __name__ == "__main__":
    key = jax.random.PRNGKey(0)
    k_x, k_w, k_b, k_t = jax.random.split(key, 4)

    N, C, H, W = 2, 4, 16, 16     # small synthetic "image" batch (NCHW)
    D = 32                        # synthetic DINO feature dim
    K = C * H * W

    output = jax.random.normal(k_x, (N, C, H, W), dtype=jnp.float32)
    target = jax.random.normal(k_t, (N, D), dtype=jnp.float32)

    # Deterministic synthetic DINO parameters (linear K -> D).
    w = jax.random.normal(k_w, (K, D), dtype=jnp.float32) * 0.02
    b = jax.random.normal(k_b, (D,), dtype=jnp.float32) * 0.01

    # One-time weight prep (K-pad + bf16 cast) hoisted out of the per-call path.
    proj_tiled = prepare_dino_projection(w, b, tk=256, batch_hint=N)  # 4 K-steps
    proj_auto = prepare_dino_projection(w, b, batch_hint=N)           # auto tk (1 step here)

    ok = True
    cases = [("cossim", proj_tiled), ("1", proj_tiled), ("2", proj_tiled),
             ("cossim", proj_auto)]
    for loss_id, proj in cases:
        got = jax.block_until_ready(dino_loss(output, target, proj, loss_id))
        ref = jax.block_until_ready(_reference(output, target, w, b, loss_id))
        # bf16 x/w with f32 accumulation: tolerance relaxed vs the f32 reference.
        if not np.allclose(np.asarray(got), np.asarray(ref), rtol=2e-2, atol=2e-2):
            ok = False
            print(f"MISMATCH loss='{loss_id}': got={np.asarray(got)}, ref={np.asarray(ref)}")

    if ok:
        print("KERNEL_OK")
</pallas_src>

<mosaic_0001>
module attributes {stable_mosaic.version = 11 : i64} {
  func.func @_dino_loss_kernel(%arg0: i32, %arg1: memref<8x256xbf16, #tpu.memory_space<vmem>>, %arg2: memref<256x32xbf16, #tpu.memory_space<vmem>>, %arg3: memref<1x32xf32, #tpu.memory_space<vmem>>, %arg4: memref<8x32xf32, #tpu.memory_space<vmem>>, %arg5: memref<8x128xf32, #tpu.memory_space<vmem>>, %arg6: memref<8x32xf32, #tpu.memory_space<vmem>>) attributes {dimension_semantics = [#tpu.dimension_semantics<arbitrary>], iteration_bounds = array<i64: 4>, scalar_prefetch = 0 : i64, scratch_operands = 1 : i64, tpu.core_type = #tpu.core_type<tc>, window_params = [{transform_indices = @transform_0, window_bounds = array<i64: 8, 256>}, {transform_indices = @transform_1, window_bounds = array<i64: 256, 32>}, {pipeline_mode = #tpu.pipeline_mode<synchronous>, transform_indices = @transform_2, window_bounds = array<i64: 1, 32>}, {pipeline_mode = #tpu.pipeline_mode<synchronous>, transform_indices = @transform_3, window_bounds = array<i64: 8, 32>}, {pipeline_mode = #tpu.pipeline_mode<synchronous>, transform_indices = @transform_4, window_bounds = array<i64: 8, 128>}]} {
    %c0_i32 = arith.constant 0 : i32
    %0 = arith.cmpi eq, %arg0, %c0_i32 : i32
    %1 = arith.extui %0 : i1 to i32
    %c0_i32_0 = arith.constant 0 : i32
    %2 = arith.cmpi ne, %1, %c0_i32_0 : i32
    scf.if %2 {
      %cst_9 = arith.constant 0.000000e+00 : f32
      %12 = vector.broadcast %cst_9 : f32 to vector<8x32xf32>
      %c0_10 = arith.constant 0 : index
      %c0_11 = arith.constant 0 : index
      %13 = vector.load %arg6[%c0_10, %c0_11] : memref<8x32xf32, #tpu.memory_space<vmem>>, vector<8x32xf32>
      tpu.vector_store %arg6[%c0_10, %c0_11], %12 {strides = array<i32>} : memref<8x32xf32, #tpu.memory_space<vmem>>, vector<8x32xf32>,
    } else {
    }
    %c0 = arith.constant 0 : index
    %c0_1 = arith.constant 0 : index
    %3 = vector.load %arg6[%c0, %c0_1] : memref<8x32xf32, #tpu.memory_space<vmem>>, vector<8x32xf32>
    %c0_2 = arith.constant 0 : index
    %c0_3 = arith.constant 0 : index
    %4 = vector.load %arg1[%c0_2, %c0_3] : memref<8x256xbf16, #tpu.memory_space<vmem>>, vector<8x256xbf16>
    %c0_4 = arith.constant 0 : index
    %c0_5 = arith.constant 0 : index
    %5 = vector.load %arg2[%c0_4, %c0_5] : memref<256x32xbf16, #tpu.memory_space<vmem>>, vector<256x32xbf16>
    %cst = arith.constant dense<0.000000e+00> : vector<8x32xf32>
    %6 = tpu.matmul %4, %5, %cst {dimension_numbers = #tpu.dot_dimension_numbers<[1], [0], [0], [1], [0, 0, 1, 1], [], []>} : vector<8x256xbf16>, vector<256x32xbf16>, vector<8x32xf32> -> vector<8x32xf32>
    %7 = arith.addf %3, %6 : vector<8x32xf32>
    %c0_6 = arith.constant 0 : index
    %c0_7 = arith.constant 0 : index
    %8 = vector.load %arg6[%c0_6, %c0_7] : memref<8x32xf32, #tpu.memory_space<vmem>>, vector<8x32xf32>
    tpu.vector_store %arg6[%c0_6, %c0_7], %7 {strides = array<i32>} : memref<8x32xf32, #tpu.memory_space<vmem>>, vector<8x32xf32>,
    %c3_i32 = arith.constant 3 : i32
    %9 = arith.cmpi eq, %arg0, %c3_i32 : i32
    %10 = arith.extui %9 : i1 to i32
    %c0_i32_8 = arith.constant 0 : i32
    %11 = arith.cmpi ne, %10, %c0_i32_8 : i32
    scf.if %11 {
      %c0_9 = arith.constant 0 : index
      %c0_10 = arith.constant 0 : index
      %12 = vector.load %arg6[%c0_9, %c0_10] : memref<8x32xf32, #tpu.memory_space<vmem>>, vector<8x32xf32>
      %c0_11 = arith.constant 0 : index
      %c0_12 = arith.constant 0 : index
      %13 = vector.load %arg3[%c0_11, %c0_12] : memref<1x32xf32, #tpu.memory_space<vmem>>, vector<1x32xf32>
      %14 = vector.broadcast %13 : vector<1x32xf32> to vector<8x32xf32>
      %15 = arith.addf %12, %14 : vector<8x32xf32>
      %c0_13 = arith.constant 0 : index
      %c0_14 = arith.constant 0 : index
      %16 = vector.load %arg4[%c0_13, %c0_14] : memref<8x32xf32, #tpu.memory_space<vmem>>, vector<8x32xf32>
      %17 = arith.mulf %15, %16 : vector<8x32xf32>
      %cst_15 = arith.constant dense<0.000000e+00> : vector<8xf32>
      %18 = vector.multi_reduction <add>, %17, %cst_15 [1] : vector<8x32xf32> to vector<8xf32>
      %19 = vector.shape_cast %18 : vector<8xf32> to vector<8x1xf32>
      %20 = arith.mulf %15, %15 : vector<8x32xf32>
      %cst_16 = arith.constant dense<0.000000e+00> : vector<8xf32>
      %21 = vector.multi_reduction <add>, %20, %cst_16 [1] : vector<8x32xf32> to vector<8xf32>
      %22 = vector.shape_cast %21 : vector<8xf32> to vector<8x1xf32>
      %23 = arith.mulf %16, %16 : vector<8x32xf32>
      %cst_17 = arith.constant dense<0.000000e+00> : vector<8xf32>
      %24 = vector.multi_reduction <add>, %23, %cst_17 [1] : vector<8x32xf32> to vector<8xf32>
      %25 = vector.shape_cast %24 : vector<8xf32> to vector<8x1xf32>
      %26 = arith.mulf %22, %25 : vector<8x1xf32>
      %cst_18 = arith.constant 1.000000e-16 : f32
      %27 = vector.broadcast %cst_18 : f32 to vector<8x1xf32>
      %28 = arith.maximumf %26, %27 : vector<8x1xf32>
      %29 = math.rsqrt %28 : vector<8x1xf32>
      %30 = arith.mulf %19, %29 : vector<8x1xf32>
      %cst_19 = arith.constant 1.000000e+00 : f32
      %31 = vector.broadcast %cst_19 : f32 to vector<8x1xf32>
      %32 = arith.subf %31, %30 : vector<8x1xf32>
      %33 = vector.shape_cast %32 : vector<8x1xf32> to vector<8x1xf32>
      %34 = vector.broadcast %33 : vector<8x1xf32> to vector<8x128xf32>
      %c0_20 = arith.constant 0 : index
      %c0_21 = arith.constant 0 : index
      %35 = vector.load %arg5[%c0_20, %c0_21] : memref<8x128xf32, #tpu.memory_space<vmem>>, vector<8x128xf32>
      tpu.vector_store %arg5[%c0_20, %c0_21], %34 {strides = array<i32>} : memref<8x128xf32, #tpu.memory_space<vmem>>, vector<8x128xf32>,
    } else {
    }
    return
  }
  func.func @transform_0(%arg0: i32) -> (i32, i32) {
    %c0_i32 = arith.constant 0 : i32
    %c0_i32_0 = arith.constant 0 : i32
    return %c0_i32, %arg0 : i32, i32
  }
  func.func @transform_1(%arg0: i32) -> (i32, i32) {
    %c0_i32 = arith.constant 0 : i32
    %c0_i32_0 = arith.constant 0 : i32
    return %arg0, %c0_i32 : i32, i32
  }
  func.func @transform_2(%arg0: i32) -> (i32, i32) {
    %c0_i32 = arith.constant 0 : i32
    %c0_i32_0 = arith.constant 0 : i32
    %c0_i32_1 = arith.constant 0 : i32
    return %c0_i32, %c0_i32_0 : i32, i32
  }
  func.func @transform_3(%arg0: i32) -> (i32, i32) {
    %c0_i32 = arith.constant 0 : i32
    %c0_i32_0 = arith.constant 0 : i32
    %c0_i32_1 = arith.constant 0 : i32
    return %c0_i32, %c0_i32_0 : i32, i32
  }
  func.func @transform_4(%arg0: i32) -> (i32, i32) {
    %c0_i32 = arith.constant 0 : i32
    %c0_i32_0 = arith.constant 0 : i32
    %c0_i32_1 = arith.constant 0 : i32
    return %c0_i32, %c0_i32_0 : i32, i32
  }
}

</mosaic_0001>

<llo_original>
// kernel: tpu_custom_call.1
$region0: #{tpu_custom_call.1}
  #allocation0 [shape = 'u32[]', space=smem, size = 0x4, offset = 0x4, fixed_abs, tag = 'smem constant byte address 0x4 - core index']
  #allocation1 [shape = 'u32[144,128]{1,0:T(1,128)}', space=vmem, size = 0x12000, scoped, tag = 'internal scratch']
  #allocation2 [shape = 'f32[8,32]{1,0:T(8,128)}', space=vmem, size = 0x1000, scoped, tag = 'scratch operand']
  %s0 = inlined_call_operand.vmem [shape: bf16[8,1024], index: 0, kind: input, shape index: {}]
  %s1 = inlined_call_operand.vmem [shape: bf16[1024,32], index: 1, kind: input, shape index: {}]
  %s2 = inlined_call_operand.vmem [shape: f32[1,32], index: 2, kind: input, shape index: {}]
  %s3 = inlined_call_operand.vmem [shape: f32[8,32], index: 3, kind: input, shape index: {}]
  %s4 = inlined_call_operand.hbm [shape: f32[8,128], index: 4, kind: output, shape index: {}]
  %s5 = sld [smem:[#allocation0]]
  $region57: #{tpu_custom_call.1} parent=0
    _
  %s7 = ssub.s32 1, %s5
  %s8 = scalar_select 0, %s7, %s5
  $region1: #{tpu_custom_call.1} parent=0
    #allocation3 [shape = 'u8[4096]{0}', space=vmem, size = 0x1000, scoped, tag = 'output window, operand 0, single buffered']
    #allocation4 [shape = 's32[2]{0}', space=sflag, size = 0x8, scoped, tag = 'scoped memory for tpu_custom_call.1']
    %9 = vsyncpa [#allocation4], 0
    loop: start=0, step=1, limit=6
    $region2: #{tpu_custom_call.1} parent=1 // loop_pre_header
      _
    $region3: #{tpu_custom_call.1} parent=1 // loop_header
      %s11 = sphi 0, %s15
      %p12 = scmp.ge.s32.totalorder %s11, 6
      %s21 = sphi 0, %s23
      %s24 = sphi 0, %s21
      %s25 = sphi 0, %s24
      %s41 = sphi 0, %s25
      %s47 = sphi 0, %s49
      %s50 = sphi 0, %s47
      %s51 = sphi 0, %s50
      %s67 = sphi 0, %s51
      %s71 = sphi 0, %s71
      %s73 = sphi 0, %s71
      %s74 = sphi 0, %s73
      %s88 = sphi 0, %s74
      %s92 = sphi 0, %s92
      %s94 = sphi 0, %s92
      %s95 = sphi 0, %s94
      %s109 = sphi 0, %s95
      %s113 = sphi 0, %s113
      %s115 = sphi 0, %s113
      %s116 = sphi 0, %s115
      %s130 = sphi 0, %s116
    $region4: #{tpu_custom_call.1} parent=1 // loop_header_branch
      %14 = sbr.rel (%p12) target = $region8
    $region5: #{tpu_custom_call.1} parent=1 // loop_body
      %s16 = ssub.s32 %s11, 1
      %s17 = ssub.s32 %s11, 2
      %s18 = sadd.s32 %s11, 1
      %s19 = ssub.s32 %s11, %s18
      %p20 = scmp.eq.s32.totalorder %s19, 0
      %s22 = sadd.s32 %s21, 1
      %s23 = scalar_select %p20, %s21, %s22
      %p26 = pneg %p20
      %p27 = scmp.eq.s32.totalorder %s11, 3
      %p28 = por %p26, %p27
      %p29 = scmp.ne.s32.totalorder %s21, %s24
      %p30 = scmp.eq.s32.totalorder %s11, 0
      %p31 = por %p29, %p30
      %p32 = scmp.ne.s32.totalorder %s21, %s24
      %p33 = scmp.eq.s32.totalorder %s16, 3
      %p34 = por %p32, %p33
      %p35 = scmp.ne.s32.totalorder %s24, %s25
      %p36 = scmp.eq.s32.totalorder %s16, 0
      %p37 = por %p35, %p36
      %p38 = scmp.ne.s32.totalorder %s24, %s25
      %p39 = scmp.eq.s32.totalorder %s17, 3
      %p40 = por %p38, %p39
      %p42 = scmp.ne.s32.totalorder %s25, %s41
      %p43 = scmp.eq.s32.totalorder %s17, 0
      %p44 = por %p42, %p43
      %s45 = ssub.s32 %s11, %s18
      %p46 = scmp.eq.s32.totalorder %s45, 0
      %s48 = sadd.s32 %s47, 1
      %s49 = scalar_select %p46, %s47, %s48
      %p52 = pneg %p46
      %p53 = scmp.eq.s32.totalorder %s11, 3
      %p54 = por %p52, %p53
      %p55 = scmp.ne.s32.totalorder %s47, %s50
      %p56 = scmp.eq.s32.totalorder %s11, 0
      %p57 = por %p55, %p56
      %p58 = scmp.ne.s32.totalorder %s47, %s50
      %p59 = scmp.eq.s32.totalorder %s16, 3
      %p60 = por %p58, %p59
      %p61 = scmp.ne.s32.totalorder %s50, %s51
      %p62 = scmp.eq.s32.totalorder %s16, 0
      %p63 = por %p61, %p62
      %p64 = scmp.ne.s32.totalorder %s50, %s51
      %p65 = scmp.eq.s32.totalorder %s17, 3
      %p66 = por %p64, %p65
      %p68 = scmp.ne.s32.totalorder %s51, %s67
      %p69 = scmp.eq.s32.totalorder %s17, 0
      %p70 = por %p68, %p69
      %s72 = sadd.s32 %s71, 1
      %p75 = scmp.eq.s32.totalorder %s11, 3
      %p76 = scmp.ne.s32.totalorder %s71, %s73
      %p77 = scmp.eq.s32.totalorder %s11, 0
      %p78 = por %p76, %p77
      %p79 = scmp.ne.s32.totalorder %s71, %s73
      %p80 = scmp.eq.s32.totalorder %s16, 3
      %p81 = por %p79, %p80
      %p82 = scmp.ne.s32.totalorder %s73, %s74
      %p83 = scmp.eq.s32.totalorder %s16, 0
      %p84 = por %p82, %p83
      %p85 = scmp.ne.s32.totalorder %s73, %s74
      %p86 = scmp.eq.s32.totalorder %s17, 3
      %p87 = por %p85, %p86
      %p89 = scmp.ne.s32.totalorder %s74, %s88
      %p90 = scmp.eq.s32.totalorder %s17, 0
      %p91 = por %p89, %p90
      %s93 = sadd.s32 %s92, 1
      %p96 = scmp.eq.s32.totalorder %s11, 3
      %p97 = scmp.ne.s32.totalorder %s92, %s94
      %p98 = scmp.eq.s32.totalorder %s11, 0
      %p99 = por %p97, %p98
      %p100 = scmp.ne.s32.totalorder %s92, %s94
      %p101 = scmp.eq.s32.totalorder %s16, 3
      %p102 = por %p100, %p101
      %p103 = scmp.ne.s32.totalorder %s94, %s95
      %p104 = scmp.eq.s32.totalorder %s16, 0
      %p105 = por %p103, %p104
      %p106 = scmp.ne.s32.totalorder %s94, %s95
      %p107 = scmp.eq.s32.totalorder %s17, 3
      %p108 = por %p106, %p107
      %p110 = scmp.ne.s32.totalorder %s95, %s109
      %p111 = scmp.eq.s32.totalorder %s17, 0
      %p112 = por %p110, %p111
      %s114 = sadd.s32 %s113, 1
      %p117 = scmp.eq.s32.totalorder %s11, 3
      %p118 = scmp.ne.s32.totalorder %s113, %s115
      %p119 = scmp.eq.s32.totalorder %s11, 0
      %p120 = por %p118, %p119
      %p121 = scmp.ne.s32.totalorder %s113, %s115
      %p122 = scmp.eq.s32.totalorder %s16, 3
      %p123 = por %p121, %p122
      %p124 = scmp.ne.s32.totalorder %s115, %s116
      %p125 = scmp.eq.s32.totalorder %s16, 0
      %p126 = por %p124, %p125
      %p127 = scmp.ne.s32.totalorder %s115, %s116
      %p128 = scmp.eq.s32.totalorder %s17, 3
      %p129 = por %p127, %p128
      %p131 = scmp.ne.s32.totalorder %s116, %s130
      %p132 = scmp.eq.s32.totalorder %s17, 0
      %p133 = por %p131, %p132
      %p134 = scmp.le.s32.totalorder 1, %s11
      %p135 = scmp.lt.s32.totalorder %s11, 5
      %p136 = pnand %p134, %p135
      %p137 = pneg %p136
      // Predicated region
      $region9: #{tpu_custom_call.1} parent=5 // pred_check
        _
      $region10: #{tpu_custom_call.1} parent=5 // pred_check_branch
        %139 = sbr.rel (%p136) target = $region12
      $region11: #{tpu_custom_call.1} parent=5 // pred_region
        %s140 = ssub.s32 %s11, 1
        // Predicated region
        $region13: #{tpu_custom_call.1} parent=11 // pred_check
          %p141 = pneg %p84
        $region14: #{tpu_custom_call.1} parent=11 // pred_check_branch
          %143 = sbr.rel (%p141) target = $region16
        $region15: #{tpu_custom_call.1} parent=11 // pred_region
          _
        $region16: #{tpu_custom_call.1} parent=11 // pred_fallthru
          _
        // Predicated region
        $region17: #{tpu_custom_call.1} parent=11 // pred_check
          %p144 = pneg %p105
        $region18: #{tpu_custom_call.1} parent=11 // pred_check_branch
          %146 = sbr.rel (%p144) target = $region20
        $region19: #{tpu_custom_call.1} parent=11 // pred_region
          _
        $region20: #{tpu_custom_call.1} parent=11 // pred_fallthru
          _
      $region12: #{tpu_custom_call.1} parent=5 // pred_fallthru
        _
      %p147 = scmp.lt.s32.totalorder %s11, 4
      // Predicated region
      $region21: #{tpu_custom_call.1} parent=5 // pred_check
        %p148 = pneg %p147
      $region22: #{tpu_custom_call.1} parent=5 // pred_check_branch
        %150 = sbr.rel (%p148) target = $region24
      $region23: #{tpu_custom_call.1} parent=5 // pred_region
        // Predicated region
        $region25: #{tpu_custom_call.1} parent=23 // pred_check
          %p151 = pneg %p31
        $region26: #{tpu_custom_call.1} parent=23 // pred_check_branch
          %153 = sbr.rel (%p151) target = $region28
        $region27: #{tpu_custom_call.1} parent=23 // pred_region
          %s154 = smul.u32 2, %s11
          %p155 = scmp.lt.s32.totalorder %s154, 7
          %s156 = scalar_select %p155, %s154, 7
          %s157 = smul.addr %s156, 4
          %s158 = scalar_lea.vmem %s0, %s157
          %s159 = smul.u32 2, %s11
        $region28: #{tpu_custom_call.1} parent=23 // pred_fallthru
          _
        // Predicated region
        $region29: #{tpu_custom_call.1} parent=23 // pred_check
          %p160 = pneg %p57
        $region30: #{tpu_custom_call.1} parent=23 // pred_check_branch
          %162 = sbr.rel (%p160) target = $region32
        $region31: #{tpu_custom_call.1} parent=23 // pred_region
          %s163 = smul.u32 32, %s11
          %p164 = scmp.lt.s32.totalorder %s163, 127
          %s165 = scalar_select %p164, %s163, 127
          %s166 = smul.addr %s165, 4
          %s167 = scalar_lea.vmem %s1, %s166
          %s168 = smul.u32 32, %s11
        $region32: #{tpu_custom_call.1} parent=23 // pred_fallthru
          _
      $region24: #{tpu_custom_call.1} parent=5 // pred_fallthru
        _
      %p169 = scmp.le.s32.totalorder 1, %s11
      %p170 = scmp.lt.s32.totalorder %s11, 5
      %p171 = pnand %p169, %p170
      %p172 = pneg %p171
      // Predicated region
      $region33: #{tpu_custom_call.1} parent=5 // pred_check
        _
      $region34: #{tpu_custom_call.1} parent=5 // pred_check_branch
        %174 = sbr.rel (%p171) target = $region36
      $region35: #{tpu_custom_call.1} parent=5 // pred_region
        %s175 = ssub.s32 %s11, 1
        %s176 = smul.u32 2, %s16
        %p177 = scmp.lt.s32.totalorder %s176, 7
        %s178 = scalar_select %p177, %s176, 7
        %s179 = smul.addr %s178, 4
        %s180 = scalar_lea.vmem %s0, %s179
        %p181 = pneg %p37
        %p182 = pneg %p34
        %s183 = smul.u32 32, %s16
        %p184 = scmp.lt.s32.totalorder %s183, 127
        %s185 = scalar_select %p184, %s183, 127
        %s186 = smul.addr %s185, 4
        %s187 = scalar_lea.vmem %s1, %s186
        %p188 = pneg %p63
        %p189 = pneg %p60
        %p190 = pneg %p84
        %p191 = pneg %p81
        %p192 = pneg %p105
        %p193 = pneg %p102
        %p194 = pneg %p126
        %p195 = pneg %p123
        %s196 = smul.u32 2, %s16
        %p197 = scmp.lt.s32.totalorder %s196, 7
        %s198 = scalar_select %p197, %s196, 7
        %s199 = smul.addr %s198, 4
        %s200 = scalar_lea.vmem %s0, %s199
        %s201 = smul.u32 2, %s16
        %s202 = smul.u32 32, %s16
        %p203 = scmp.lt.s32.totalorder %s202, 127
        %s204 = scalar_select %p203, %s202, 127
        %s205 = smul.addr %s204, 4
        %s206 = scalar_lea.vmem %s1, %s205
        %s207 = smul.u32 32, %s16
        %p209 = scmp.eq.s32.totalorder %s16, 0
        // Predicated region
        $region37: #{tpu_custom_call.1} parent=35 // pred_check
          %p210 = pneg %p209
        $region38: #{tpu_custom_call.1} parent=35 // pred_check_branch
          %212 = sbr.rel (%p210) target = $region40
        $region39: #{tpu_custom_call.1} parent=35 // pred_region
          %vm213 = vcmask 261120
          %214 = vst.msk [vmem:[#allocation2] sm:$0xff] %vm213, 0.0
        $region40: #{tpu_custom_call.1} parent=35 // pred_fallthru
          _
        %v215 = vld [vmem:[#allocation2] sm:$0xff]
        %v216 = vld [vmem:[%s200] sm:$0xff]
        %v217 = vld [vmem:[%s206] sm:$0xf]
        %v218 = vld [vmem:[%s206 + $0x4] sm:$0xf]
        %v219 = vld [vmem:[%s206 + $0x8] sm:$0xf]
        %v220 = vld [vmem:[%s206 + $0xc] sm:$0xf]
        %v221 = vld [vmem:[%s206 + $0x10] sm:$0xf]
        %v222 = vld [vmem:[%s206 + $0x14] sm:$0xf]
        %v223 = vld [vmem:[%s206 + $0x18] sm:$0xf]
        %v224 = vld [vmem:[%s206 + $0x1c] sm:$0xf]
        %v225 = vld [vmem:[%s206 + $0x20] sm:$0xf]
        %v226 = vld [vmem:[%s206 + $0x24] sm:$0xf]
        %v227 = vld [vmem:[%s206 + $0x28] sm:$0xf]
        %v228 = vld [vmem:[%s206 + $0x2c] sm:$0xf]
        %v229 = vld [vmem:[%s206 + $0x30] sm:$0xf]
        %v230 = vld [vmem:[%s206 + $0x34] sm:$0xf]
        %v231 = vld [vmem:[%s206 + $0x38] sm:$0xf]
        %v232 = vld [vmem:[%s206 + $0x3c] sm:$0xf]
        %v233 = vld [vmem:[%s206 + $0x40] sm:$0xf]
        %v234 = vld [vmem:[%s206 + $0x44] sm:$0xf]
        %v235 = vld [vmem:[%s206 + $0x48] sm:$0xf]
        %v236 = vld [vmem:[%s206 + $0x4c] sm:$0xf]
        %v237 = vld [vmem:[%s206 + $0x50] sm:$0xf]
        %v238 = vld [vmem:[%s206 + $0x54] sm:$0xf]
        %v239 = vld [vmem:[%s206 + $0x58] sm:$0xf]
        %v240 = vld [vmem:[%s206 + $0x5c] sm:$0xf]
        %v241 = vld [vmem:[%s206 + $0x60] sm:$0xf]
        %v242 = vld [vmem:[%s206 + $0x64] sm:$0xf]
        %v243 = vld [vmem:[%s206 + $0x68] sm:$0xf]
        %v244 = vld [vmem:[%s206 + $0x6c] sm:$0xf]
        %v245 = vld [vmem:[%s206 + $0x70] sm:$0xf]
        %v246 = vld [vmem:[%s206 + $0x74] sm:$0xf]
        %v247 = vld [vmem:[%s206 + $0x78] sm:$0xf]
        %v248 = vld [vmem:[%s206 + $0x7c] sm:$0xf]
        %v250 = vunpack.c.l.b16 %v216
        %v251 = vunpack.c.h.b16 %v216
        %v252 = vpack.c.b16 %v250, %v250
        %v253 = vpack.c.b16 %v251, %v251
        %v288 = vunpack.c.l.b16 %v217
        %v289 = vunpack.c.l.b16 %v218
        %v290 = vunpack.c.l.b16 %v219
        %v291 = vunpack.c.l.b16 %v220
        %v292 = vunpack.c.l.b16 %v221
        %v293 = vunpack.c.l.b16 %v222
        %v294 = vunpack.c.l.b16 %v223
        %v295 = vunpack.c.l.b16 %v224
        %v296 = vunpack.c.l.b16 %v225
        %v297 = vunpack.c.l.b16 %v226
        %v298 = vunpack.c.l.b16 %v227
        %v299 = vunpack.c.l.b16 %v228
        %v300 = vunpack.c.l.b16 %v229
        %v301 = vunpack.c.l.b16 %v230
        %v302 = vunpack.c.l.b16 %v231
        %v303 = vunpack.c.l.b16 %v232
        %v304 = vunpack.c.l.b16 %v233
        %v305 = vunpack.c.l.b16 %v234
        %v306 = vunpack.c.l.b16 %v235
        %v307 = vunpack.c.l.b16 %v236
        %v308 = vunpack.c.l.b16 %v237
        %v309 = vunpack.c.l.b16 %v238
        %v310 = vunpack.c.l.b16 %v239
        %v311 = vunpack.c.l.b16 %v240
        %v312 = vunpack.c.l.b16 %v241
        %v313 = vunpack.c.l.b16 %v242
        %v314 = vunpack.c.l.b16 %v243
        %v315 = vunpack.c.l.b16 %v244
        %v316 = vunpack.c.l.b16 %v245
        %v317 = vunpack.c.l.b16 %v246
        %v318 = vunpack.c.l.b16 %v247
        %v319 = vunpack.c.l.b16 %v248
        %v320 = vpack.c.b16 %v289, %v288
        %v321 = vpack.c.b16 %v291, %v290
        %v322 = vpack.c.b16 %v293, %v292
        %v323 = vpack.c.b16 %v295, %v294
        %v324 = vpack.c.b16 %v297, %v296
        %v325 = vpack.c.b16 %v299, %v298
        %v326 = vpack.c.b16 %v301, %v300
        %v327 = vpack.c.b16 %v303, %v302
        %v328 = vpack.c.b16 %v305, %v304
        %v329 = vpack.c.b16 %v307, %v306
        %v330 = vpack.c.b16 %v309, %v308
        %v331 = vpack.c.b16 %v311, %v310
        %v332 = vpack.c.b16 %v313, %v312
        %v333 = vpack.c.b16 %v315, %v314
        %v334 = vpack.c.b16 %v317, %v316
        %v335 = vpack.c.b16 %v319, %v318
        %352 = vmatprep.subr.bf16.mxu0 0
        %353 = vmatpush1.bf16.msra.mxu0 %v320
        %354 = vmatprep.subr.bf16.mxu0 0
        %355 = vmatpush1.bf16.msra.mxu0 %v321
        %356 = vmatprep.subr.bf16.mxu0 0
        %357 = vmatpush1.bf16.msra.mxu0 %v322
        %358 = vmatprep.subr.bf16.mxu0 0
        %359 = vmatpush1.bf16.msra.mxu0 %v323
        %360 = vmatprep.subr.bf16.mxu0 0
        %361 = vmatpush1.bf16.msra.mxu0 %v324
        %362 = vmatprep.subr.bf16.mxu0 0
        %363 = vmatpush1.bf16.msra.mxu0 %v325
        %364 = vmatprep.subr.bf16.mxu0 0
        %365 = vmatpush1.bf16.msra.mxu0 %v326
        %366 = vmatprep.subr.bf16.mxu0 0
        %367 = vmatpush1.bf16.msra.mxu0 %v327
        %368 = vmatprep.subr.bf16.mxu0 0
        %369 = vmatpush1.bf16.msra.mxu0 %v328
        %370 = vmatprep.subr.bf16.mxu0 0
        %371 = vmatpush1.bf16.msra.mxu0 %v329
        %372 = vmatprep.subr.bf16.mxu0 0
        %373 = vmatpush1.bf16.msra.mxu0 %v330
        %374 = vmatprep.subr.bf16.mxu0 0
        %375 = vmatpush1.bf16.msra.mxu0 %v331
        %376 = vmatprep.subr.bf16.mxu0 0
        %377 = vmatpush1.bf16.msra.mxu0 %v332
        %378 = vmatprep.subr.bf16.mxu0 0
        %379 = vmatpush1.bf16.msra.mxu0 %v333
        %380 = vmatprep.subr.bf16.mxu0 0
        %381 = vmatpush1.bf16.msra.mxu0 %v334
        %382 = vmatprep.subr.bf16.mxu0 0
        %383 = vmatpush1.bf16.msra.mxu0 %v335
        %384 = vmatprep.mubr.bf16.mxu0 %v253
        %385 = vmatmul.mubr.bf16.gmra.mrb[0].mxu0 %v252
        %v386 = vpop.f32.mrb[0].mxu0
        %v387 = vadd.f32 0.0, %v386
        %v388 = vpop.f32.mrb[0].mxu0
        %v389 = vpop.f32.mrb[0].mxu0
        %v390 = vpop.f32.mrb[0].mxu0
        %391 = vdwg.mxu0
        %v392 = vadd.f32 %v215, %v387
        %vm393 = vcmask 261120
        %394 = vst.msk [vmem:[#allocation2] sm:$0xff] %vm393, %v392
        %p395 = scmp.eq.s32.totalorder %s16, 3
        // Predicated region
        $region41: #{tpu_custom_call.1} parent=35 // pred_check
          %p396 = pneg %p395
        $region42: #{tpu_custom_call.1} parent=35 // pred_check_branch
          %398 = sbr.rel (%p396) target = $region44
        $region43: #{tpu_custom_call.1} parent=35 // pred_region
          %v399 = vld [vmem:[#allocation2] sm:$0xff]
          %v400 = vld [vmem:[%s2] sm:$0x1]
          %v402 = vlaneseq
          %v403 = vshrl.u32 %v402, 7
          %v404 = vsub.s32 0, %v403
          %v405 = vrot.slane %v400, %v404
          %v407 = vadd.f32 %v399, %v405
          %v408 = vld [vmem:[%s3] sm:$0xff]
          %v409 = vmul.f32 %v407, %v408
          %v410 = vsel %vm393, %v409, 0.0
          %411 = vadd.xlane.f32.xlu0 %v410
          %v412 = vpop.xlane.xlu0 %411
          %v413 = vmul.f32 %v407, %v407
          %v414 = vsel %vm393, %v413, 0.0
          %415 = vadd.xlane.f32.xlu0 %v414
          %v416 = vpop.xlane.xlu0 %415
          %v417 = vmul.f32 %v408, %v408
          %v418 = vsel %vm393, %v417, 0.0
          %419 = vadd.xlane.f32.xlu0 %v418
          %v420 = vpop.xlane.xlu0 %419
          %v421 = vmul.f32 %v416, %v420
          %v422 = vmax.f32 %v421, 1e-16
          %v423 = vrsqrt.pop %v422
          %v424 = vmul.f32 %v412, %v423
          %v425 = vsub.f32 1.0, %v424
          %426 = vst [vmem:[#allocation3] sm:$0xff] %v425
        $region44: #{tpu_custom_call.1} parent=35 // pred_fallthru
          _
        // Predicated region
        $region45: #{tpu_custom_call.1} parent=35 // pred_check
          %p427 = pneg %p123
        $region46: #{tpu_custom_call.1} parent=35 // pred_check_branch
          %429 = sbr.rel (%p427) target = $region48
        $region47: #{tpu_custom_call.1} parent=35 // pred_region
          %s431 = ssub.s32 128, 128
          %432 = vsyncadd [#allocation4], %s431
          %s434 = sshll.u32 [#allocation3], 4
          %s435 = int_to_ptr.vmem [resolvable:$true] %s434
          %437 = dma.vmem_to_hbm [thread:$0]  %s435, 128, %s4, [#allocation4]
        $region48: #{tpu_custom_call.1} parent=35 // pred_fallthru
          _
        // Predicated region
        $region49: #{tpu_custom_call.1} parent=35 // pred_check
          %p438 = pneg %p123
        $region50: #{tpu_custom_call.1} parent=35 // pred_check_branch
          %440 = sbr.rel (%p438) target = $region52
        $region51: #{tpu_custom_call.1} parent=35 // pred_region
          %441 = dma.done [#allocation4], 128
        $region52: #{tpu_custom_call.1} parent=35 // pred_fallthru
          _
      $region36: #{tpu_custom_call.1} parent=5 // pred_fallthru
        _
      %p442 = scmp.le.s32.totalorder 2, %s11
      // Predicated region
      $region53: #{tpu_custom_call.1} parent=5 // pred_check
        %p443 = pneg %p442
      $region54: #{tpu_custom_call.1} parent=5 // pred_check_branch
        %445 = sbr.rel (%p443) target = $region56
      $region55: #{tpu_custom_call.1} parent=5 // pred_region
        %s446 = ssub.s32 %s11, 2
      $region56: #{tpu_custom_call.1} parent=5 // pred_fallthru
        _
    $region6: #{tpu_custom_call.1} parent=1 // loop_footer
      %s15 = sadd.s32 1, %s11
    $region7: #{tpu_custom_call.1} parent=1 // loop_footer_branch
      %10 = sbr.rel target = $region3
    $region8: #{tpu_custom_call.1} parent=1 // loop_exit
      _
    %447 = vsyncpa [#allocation4], 1
    %s448 = scalar_lea.sflag [#allocation4], 1
    %449 = vsyncpa %s448, 1

</llo_original>
